<compile_context>
chip_gen: v7x
topology: tpu7x:2x2x1
jax: 0.10.0
libtpu: 0.0.40
codegen_flags: <defaults>
</compile_context>

<pallas_src>
import jax
import jax.numpy as jnp
from jax import lax
from jax.experimental import pallas as pl
from jax.experimental.pallas import tpu as pltpu

_SQRT_HALF = 0.7071067811865476


def fc_bn_gelu_kernel(x_ref, w_ref, shift_ref, o_ref):
    # x_ref:     (1, C_in, tn)  input tile, native dtype (f32 or bf16), NCL layout
    # w_ref:     (C_out, C_in)  bf16 weight with the BN scale pre-folded
    # shift_ref: (C_out, 1)     f32 folded BN shift = beta - mean * scale
    # o_ref:     (1, C_out, tn) output tile (lane-dense along N)
    x = x_ref[0].astype(jnp.bfloat16)          # in-kernel cast (VPU) -> no extra HBM pass
    w = w_ref[...]                             # (C_out, C_in) bf16
    # MXU matmul with f32 accumulation.
    y = jnp.dot(w, x, preferred_element_type=jnp.float32)       # (C_out, tn) f32
    y = y + shift_ref[...]                                       # broadcast (C_out, 1)
    # Exact GELU (torch.nn.GELU() default): 0.5 * y * (1 + erf(y / sqrt(2))), f32 epilogue.
    g = 0.5 * y * (1.0 + lax.erf(y * jnp.float32(_SQRT_HALF)))
    o_ref[0] = g.astype(o_ref.dtype)


def fcbnrelu1d_forward(x, weight, gamma, beta, running_mean, running_var,
                       eps=1e-5, tn=None, out_dtype=jnp.bfloat16,
                       vmem_budget_bytes=48 * 1024 * 1024):
    """Fused Conv1d(k=1, bias=False) + BatchNorm1d(inference) + GELU.

    x:      (B, C_in, N)  NCL (PyTorch Conv1d layout), f32 or bf16
    weight: (C_out, C_in, 1)  like torch.nn.Conv1d.weight
    returns (B, C_out, N) in `out_dtype` (bf16 by default to halve output HBM traffic).
    """
    B, C_in, N = x.shape
    C_out = weight.shape[0]

    x_item = jnp.dtype(x.dtype).itemsize
    out_item = jnp.dtype(out_dtype).itemsize

    # ---- fold BatchNorm into the weight (scale) and a per-channel shift (fold in f32) ----
    scale = (gamma.astype(jnp.float32)
             / jnp.sqrt(running_var.astype(jnp.float32) + eps))                 # (C_out,)
    shift = (beta.astype(jnp.float32)
             - running_mean.astype(jnp.float32) * scale).reshape(C_out, 1)      # (C_out, 1)
    w_folded = (weight[:, :, 0].astype(jnp.float32)
                * scale[:, None]).astype(jnp.bfloat16)                          # (C_out, C_in)

    # ---- derive the N-tile from a VMEM budget (double-buffered x/out tiles + weight) ----
    if tn is None:
        per_col = 2 * (C_in * x_item + C_out * out_item)       # per column of N, 2 buffers
        fixed = 2 * (C_out * C_in * 2) + 2 * (C_out * 4)       # resident weight + shift
        tn = max(128, (vmem_budget_bytes - fixed) // max(per_col, 1))
        tn = min(4096, tn)                                     # amortize ~0.35us/grid-step
    tn = max(128, (int(tn) // 128) * 128)                      # lane-dense multiple of 128
    tn = min(tn, int(pl.cdiv(N, 128)) * 128)                   # never larger than needed
    if B == 1 and tn >= N and N > 128:
        # v7x has 2 TensorCores sharding "parallel" grid axes: keep >= 2 grid steps.
        tn = max(128, int(pl.cdiv(int(pl.cdiv(N, 2)), 128)) * 128)
    n_tiles = int(pl.cdiv(N, tn))

    # vmem limit consistent with the derived tile (safe on v5e/v6e/v7x).
    est_vmem = (2 * tn * (C_in * x_item + C_out * out_item)
                + 2 * (C_out * C_in * 2) + 2 * (C_out * 4))
    vmem_limit = int(min(max(32 * 1024 * 1024, est_vmem + 8 * 1024 * 1024),
                         112 * 1024 * 1024))

    bytes_accessed = (B * C_in * N * x_item             # x read once (no cast pass)
                      + C_out * C_in * 2 + C_out * 4    # folded weight (bf16) + shift
                      + B * C_out * N * out_item)       # narrow output write

    out = pl.pallas_call(
        fc_bn_gelu_kernel,
        out_shape=jax.ShapeDtypeStruct((B, C_out, N), out_dtype),
        grid_spec=pltpu.PrefetchScalarGridSpec(
            num_scalar_prefetch=0,
            grid=(B, n_tiles),
            in_specs=[
                # Ragged last N-tile is handled by Pallas: reads past N are garbage
                # columns that never mix across columns; output edge block is masked.
                pl.BlockSpec((1, C_in, tn), lambda b, n: (b, 0, n)),
                # Constant index_maps: fetched once, resident across the whole grid.
                pl.BlockSpec((C_out, C_in), lambda b, n: (0, 0)),
                pl.BlockSpec((C_out, 1), lambda b, n: (0, 0)),
            ],
            out_specs=pl.BlockSpec((1, C_out, tn), lambda b, n: (b, 0, n)),
        ),
        compiler_params=pltpu.CompilerParams(
            dimension_semantics=("parallel", "parallel"),
            vmem_limit_bytes=vmem_limit,
        ),
        cost_estimate=pl.CostEstimate(
            flops=2 * B * N * C_in * C_out,
            transcendentals=B * N * C_out,
            bytes_accessed=int(bytes_accessed),
        ),
    )(x, w_folded, shift)
    return out


def reference_forward(x, weight, gamma, beta, running_mean, running_var, eps=1e-5):
    # pure-JAX f32 reference: Conv1d(k=1, bias=False) + BN(inference) + exact GELU
    y = jnp.einsum("bcn,oc->bon", x, weight[:, :, 0])
    scale = gamma / jnp.sqrt(running_var + eps)
    shift = beta - running_mean * scale
    y = y * scale[None, :, None] + shift[None, :, None]
    return jax.nn.gelu(y, approximate=False)


if __name__ == "__main__":
    key = jax.random.PRNGKey(0)
    k_x, k_w, k_g, k_b, k_m, k_v = jax.random.split(key, 6)

    # Small shapes; N=200 deliberately NOT a multiple of 128 to exercise the ragged edge.
    B, C_in, C_out, N = 2, 16, 32, 200
    x = jax.random.normal(k_x, (B, C_in, N), dtype=jnp.float32)

    # deterministic parameter init (shapes match nn.Conv1d / nn.BatchNorm1d)
    weight = 0.1 * jax.random.normal(k_w, (C_out, C_in, 1), dtype=jnp.float32)
    gamma = 1.0 + 0.1 * jax.random.normal(k_g, (C_out,), dtype=jnp.float32)
    beta = 0.1 * jax.random.normal(k_b, (C_out,), dtype=jnp.float32)
    running_mean = 0.05 * jax.random.normal(k_m, (C_out,), dtype=jnp.float32)
    running_var = jnp.abs(1.0 + 0.1 * jax.random.normal(k_v, (C_out,), dtype=jnp.float32))

    ref = reference_forward(x, weight, gamma, beta, running_mean, running_var)

    # Default call: auto-derived tn (single ragged N-tile), bf16 output.
    out = fcbnrelu1d_forward(x, weight, gamma, beta, running_mean, running_var)
    out = jax.block_until_ready(out)
    assert out.shape == (B, C_out, N)
    assert out.dtype == jnp.bfloat16
    assert jnp.allclose(out.astype(jnp.float32), ref, atol=3e-2, rtol=3e-2), \
        "mismatch vs reference (default tiling)"

    # Forced small tile: exercises a multi-step grid with a masked ragged edge block.
    out2 = fcbnrelu1d_forward(x, weight, gamma, beta, running_mean, running_var, tn=128)
    out2 = jax.block_until_ready(out2)
    assert jnp.allclose(out2.astype(jnp.float32), ref, atol=3e-2, rtol=3e-2), \
        "mismatch vs reference (tn=128 tiling)"

    print("KERNEL_OK")
</pallas_src>

<mosaic_0001>
module attributes {stable_mosaic.version = 11 : i64} {
  func.func @fc_bn_gelu_kernel(%arg0: i32, %arg1: i32, %arg2: memref<1x16x256xf32, #tpu.memory_space<vmem>>, %arg3: memref<32x16xbf16, #tpu.memory_space<vmem>>, %arg4: memref<32x1xf32, #tpu.memory_space<vmem>>, %arg5: memref<1x32x256xbf16, #tpu.memory_space<vmem>>) attributes {dimension_semantics = [#tpu.dimension_semantics<parallel>, #tpu.dimension_semantics<parallel>], iteration_bounds = array<i64: 2, 1>, scalar_prefetch = 0 : i64, scratch_operands = 0 : i64, tpu.core_type = #tpu.core_type<tc>, window_params = [{transform_indices = @transform_0, window_bounds = array<i64: 1, 16, 256>}, {pipeline_mode = #tpu.pipeline_mode<synchronous>, transform_indices = @transform_1, window_bounds = array<i64: 32, 16>}, {pipeline_mode = #tpu.pipeline_mode<synchronous>, transform_indices = @transform_2, window_bounds = array<i64: 32, 1>}, {transform_indices = @transform_3, window_bounds = array<i64: 1, 32, 256>}]} {
    %c0 = arith.constant 0 : index
    %c0_0 = arith.constant 0 : index
    %c0_1 = arith.constant 0 : index
    %0 = vector.load %arg2[%c0, %c0_0, %c0_1] : memref<1x16x256xf32, #tpu.memory_space<vmem>>, vector<1x16x256xf32>
    %1 = vector.shape_cast %0 : vector<1x16x256xf32> to vector<16x256xf32>
    %2 = arith.truncf %1 : vector<16x256xf32> to vector<16x256xbf16>
    %c0_2 = arith.constant 0 : index
    %c0_3 = arith.constant 0 : index
    %3 = vector.load %arg3[%c0_2, %c0_3] : memref<32x16xbf16, #tpu.memory_space<vmem>>, vector<32x16xbf16>
    %cst = arith.constant dense<0.000000e+00> : vector<32x256xf32>
    %4 = tpu.matmul %3, %2, %cst {dimension_numbers = #tpu.dot_dimension_numbers<[1], [0], [0], [1], [0, 0, 1, 1], [], []>} : vector<32x16xbf16>, vector<16x256xbf16>, vector<32x256xf32> -> vector<32x256xf32>
    %c0_4 = arith.constant 0 : index
    %c0_5 = arith.constant 0 : index
    %5 = vector.load %arg4[%c0_4, %c0_5] : memref<32x1xf32, #tpu.memory_space<vmem>>, vector<32x1xf32>
    %6 = vector.broadcast %5 : vector<32x1xf32> to vector<32x256xf32>
    %7 = arith.addf %4, %6 : vector<32x256xf32>
    %cst_6 = arith.constant 5.000000e-01 : f32
    %8 = vector.broadcast %cst_6 : f32 to vector<32x256xf32>
    %9 = arith.mulf %8, %7 : vector<32x256xf32>
    %cst_7 = arith.constant 0.707106769 : f32
    %10 = vector.broadcast %cst_7 : f32 to vector<32x256xf32>
    %11 = arith.mulf %7, %10 : vector<32x256xf32>
    %12 = math.erf %11 : vector<32x256xf32>
    %cst_8 = arith.constant 1.000000e+00 : f32
    %13 = vector.broadcast %cst_8 : f32 to vector<32x256xf32>
    %14 = arith.addf %13, %12 : vector<32x256xf32>
    %15 = arith.mulf %9, %14 : vector<32x256xf32>
    %16 = arith.truncf %15 : vector<32x256xf32> to vector<32x256xbf16>
    %c0_9 = arith.constant 0 : index
    %c0_10 = arith.constant 0 : index
    %c0_11 = arith.constant 0 : index
    %17 = vector.load %arg5[%c0_9, %c0_10, %c0_11] : memref<1x32x256xbf16, #tpu.memory_space<vmem>>, vector<1x32x256xbf16>
    %18 = vector.shape_cast %17 : vector<1x32x256xbf16> to vector<32x256xbf16>
    %19 = vector.shape_cast %16 : vector<32x256xbf16> to vector<1x32x256xbf16>
    tpu.vector_store %arg5[%c0_9, %c0_10, %c0_11], %19 {strides = array<i32>} : memref<1x32x256xbf16, #tpu.memory_space<vmem>>, vector<1x32x256xbf16>,
    return
  }
  func.func @transform_0(%arg0: i32, %arg1: i32) -> (i32, i32, i32) {
    %c0_i32 = arith.constant 0 : i32
    %c0_i32_0 = arith.constant 0 : i32
    return %arg0, %c0_i32, %arg1 : i32, i32, i32
  }
  func.func @transform_1(%arg0: i32, %arg1: i32) -> (i32, i32) {
    %c0_i32 = arith.constant 0 : i32
    %c0_i32_0 = arith.constant 0 : i32
    %c0_i32_1 = arith.constant 0 : i32
    return %c0_i32, %c0_i32_0 : i32, i32
  }
  func.func @transform_2(%arg0: i32, %arg1: i32) -> (i32, i32) {
    %c0_i32 = arith.constant 0 : i32
    %c0_i32_0 = arith.constant 0 : i32
    %c0_i32_1 = arith.constant 0 : i32
    return %c0_i32, %c0_i32_0 : i32, i32
  }
  func.func @transform_3(%arg0: i32, %arg1: i32) -> (i32, i32, i32) {
    %c0_i32 = arith.constant 0 : i32
    %c0_i32_0 = arith.constant 0 : i32
    return %arg0, %c0_i32, %arg1 : i32, i32, i32
  }
}

</mosaic_0001>

<llo_original>
// kernel: tpu_custom_call.1
$region0: #{tpu_custom_call.1}
  #allocation0 [shape = 'u32[]', space=smem, size = 0x4, offset = 0x4, fixed_abs, tag = 'smem constant byte address 0x4 - core index']
  #allocation1 [shape = 'u32[144,128]{1,0:T(1,128)}', space=vmem, size = 0x12000, scoped, tag = 'internal scratch']
  %s0 = inlined_call_operand.hbm [shape: f32[2,16,200], index: 0, kind: input, shape index: {}]
  %s1 = inlined_call_operand.vmem [shape: bf16[32,16], index: 1, kind: input, shape index: {}]
  %s2 = inlined_call_operand.vmem [shape: f32[32,1], index: 2, kind: input, shape index: {}]
  %s3 = inlined_call_operand.hbm [shape: bf16[2,32,200], index: 3, kind: output, shape index: {}]
  %s4 = sld [smem:[#allocation0]]
  $region49: #{tpu_custom_call.1} parent=0
    _
  %s6 = ssub.s32 1, %s4
  %s7 = scalar_select 0, %s6, %s4
  $region1: #{tpu_custom_call.1} parent=0
    #allocation2 [shape = 'u8[32768]{0}', space=vmem, size = 0x8000, scoped, tag = 'input window, operand 0']
    #allocation3 [shape = 's32[2]{0}', space=sflag, size = 0x8, scoped, tag = 'scoped memory for tpu_custom_call.1']
    #allocation4 [shape = 's32[2]{0}', space=sflag, size = 0x8, scoped, tag = 'scoped memory for tpu_custom_call.1']
    #allocation5 [shape = 'u8[32768]{0}', space=vmem, size = 0x8000, scoped, tag = 'output window, operand 0']
    %8 = vsyncpa [#allocation3], 0
    %s9 = scalar_lea.sflag [#allocation3], 1
    %10 = vsyncpa %s9, 0
    %11 = vsyncpa [#allocation4], 0
    %s12 = scalar_lea.sflag [#allocation4], 1
    %13 = vsyncpa %s12, 0
    loop: start=0, step=1, limit=4
    $region2: #{tpu_custom_call.1} parent=1 // loop_pre_header
      _
    $region3: #{tpu_custom_call.1} parent=1 // loop_header
      %s15 = sphi 0, %s19
      %p16 = scmp.ge.s32.totalorder %s15, 4
      %s22 = sphi 0, %s34
      %s23 = sphi 0, %s30
      %s24 = sphi 0, %s22
      %s25 = sphi 0, %s23
      %s26 = sphi 0, %s24
      %s27 = sphi 0, %s25
      %s39 = sphi 0, %s41
      %s42 = sphi 0, %s39
      %s43 = sphi 0, %s42
      %s59 = sphi 0, %s43
      %s63 = sphi 0, %s63
      %s65 = sphi 0, %s63
      %s66 = sphi 0, %s65
      %s80 = sphi 0, %s66
      %s84 = sphi 0, %s84
      %s86 = sphi 0, %s84
      %s87 = sphi 0, %s86
      %s101 = sphi 0, %s87
      %s109 = sphi 0, %s111
      %s112 = sphi 0, %s109
      %s113 = sphi 0, %s112
      %s129 = sphi 0, %s113
    $region4: #{tpu_custom_call.1} parent=1 // loop_header_branch
      %18 = sbr.rel (%p16) target = $region8
    $region5: #{tpu_custom_call.1} parent=1 // loop_body
      %s20 = ssub.s32 %s15, 1
      %s21 = ssub.s32 %s15, 2
      %s28 = sadd.s32 1, %s23
      %p29 = scmp.ge.s32.totalorder %s28, 1
      %s30 = scalar_select %p29, 0, %s28
      %s31 = sadd.s32 1, %s22
      %s32 = scalar_select %p29, %s31, %s22
      %p33 = scmp.ge.s32.totalorder %s32, 2
      %s34 = scalar_select %p33, 0, %s32
      %s35 = ssub.s32 %s22, %s34
      %s36 = ssub.s32 %s23, %s30
      %s37 = sor.u32 %s35, %s36
      %p38 = scmp.eq.s32.totalorder %s37, 0
      %s40 = sadd.s32 %s39, 1
      %s41 = scalar_select %p38, %s39, %s40
      %p44 = pneg %p38
      %p45 = scmp.eq.s32.totalorder %s15, 1
      %p46 = por %p44, %p45
      %p47 = scmp.ne.s32.totalorder %s39, %s42
      %p48 = scmp.eq.s32.totalorder %s15, 0
      %p49 = por %p47, %p48
      %p50 = scmp.ne.s32.totalorder %s39, %s42
      %p51 = scmp.eq.s32.totalorder %s20, 1
      %p52 = por %p50, %p51
      %p53 = scmp.ne.s32.totalorder %s42, %s43
      %p54 = scmp.eq.s32.totalorder %s20, 0
      %p55 = por %p53, %p54
      %p56 = scmp.ne.s32.totalorder %s42, %s43
      %p57 = scmp.eq.s32.totalorder %s21, 1
      %p58 = por %p56, %p57
      %p60 = scmp.ne.s32.totalorder %s43, %s59
      %p61 = scmp.eq.s32.totalorder %s21, 0
      %p62 = por %p60, %p61
      %s64 = sadd.s32 %s63, 1
      %p67 = scmp.eq.s32.totalorder %s15, 1
      %p68 = scmp.ne.s32.totalorder %s63, %s65
      %p69 = scmp.eq.s32.totalorder %s15, 0
      %p70 = por %p68, %p69
      %p71 = scmp.ne.s32.totalorder %s63, %s65
      %p72 = scmp.eq.s32.totalorder %s20, 1
      %p73 = por %p71, %p72
      %p74 = scmp.ne.s32.totalorder %s65, %s66
      %p75 = scmp.eq.s32.totalorder %s20, 0
      %p76 = por %p74, %p75
      %p77 = scmp.ne.s32.totalorder %s65, %s66
      %p78 = scmp.eq.s32.totalorder %s21, 1
      %p79 = por %p77, %p78
      %p81 = scmp.ne.s32.totalorder %s66, %s80
      %p82 = scmp.eq.s32.totalorder %s21, 0
      %p83 = por %p81, %p82
      %s85 = sadd.s32 %s84, 1
      %p88 = scmp.eq.s32.totalorder %s15, 1
      %p89 = scmp.ne.s32.totalorder %s84, %s86
      %p90 = scmp.eq.s32.totalorder %s15, 0
      %p91 = por %p89, %p90
      %p92 = scmp.ne.s32.totalorder %s84, %s86
      %p93 = scmp.eq.s32.totalorder %s20, 1
      %p94 = por %p92, %p93
      %p95 = scmp.ne.s32.totalorder %s86, %s87
      %p96 = scmp.eq.s32.totalorder %s20, 0
      %p97 = por %p95, %p96
      %p98 = scmp.ne.s32.totalorder %s86, %s87
      %p99 = scmp.eq.s32.totalorder %s21, 1
      %p100 = por %p98, %p99
      %p102 = scmp.ne.s32.totalorder %s87, %s101
      %p103 = scmp.eq.s32.totalorder %s21, 0
      %p104 = por %p102, %p103
      %s105 = ssub.s32 %s22, %s34
      %s106 = ssub.s32 %s23, %s30
      %s107 = sor.u32 %s105, %s106
      %p108 = scmp.eq.s32.totalorder %s107, 0
      %s110 = sadd.s32 %s109, 1
      %s111 = scalar_select %p108, %s109, %s110
      %p114 = pneg %p108
      %p115 = scmp.eq.s32.totalorder %s15, 1
      %p116 = por %p114, %p115
      %p117 = scmp.ne.s32.totalorder %s109, %s112
      %p118 = scmp.eq.s32.totalorder %s15, 0
      %p119 = por %p117, %p118
      %p120 = scmp.ne.s32.totalorder %s109, %s112
      %p121 = scmp.eq.s32.totalorder %s20, 1
      %p122 = por %p120, %p121
      %p123 = scmp.ne.s32.totalorder %s112, %s113
      %p124 = scmp.eq.s32.totalorder %s20, 0
      %p125 = por %p123, %p124
      %p126 = scmp.ne.s32.totalorder %s112, %s113
      %p127 = scmp.eq.s32.totalorder %s21, 1
      %p128 = por %p126, %p127
      %p130 = scmp.ne.s32.totalorder %s113, %s129
      %p131 = scmp.eq.s32.totalorder %s21, 0
      %p132 = por %p130, %p131
      %p133 = scmp.le.s32.totalorder 1, %s15
      %p134 = scmp.lt.s32.totalorder %s15, 3
      %p135 = pnand %p133, %p134
      %p136 = pneg %p135
      // Predicated region
      $region9: #{tpu_custom_call.1} parent=5 // pred_check
        _
      $region10: #{tpu_custom_call.1} parent=5 // pred_check_branch
        %138 = sbr.rel (%p135) target = $region12
      $region11: #{tpu_custom_call.1} parent=5 // pred_region
        %s139 = ssub.s32 %s15, 1
        // Predicated region
        $region13: #{tpu_custom_call.1} parent=11 // pred_check
          %p140 = pneg %p76
        $region14: #{tpu_custom_call.1} parent=11 // pred_check_branch
          %142 = sbr.rel (%p140) target = $region16
        $region15: #{tpu_custom_call.1} parent=11 // pred_region
          _
        $region16: #{tpu_custom_call.1} parent=11 // pred_fallthru
          _
        // Predicated region
        $region17: #{tpu_custom_call.1} parent=11 // pred_check
          %p143 = pneg %p97
        $region18: #{tpu_custom_call.1} parent=11 // pred_check_branch
          %145 = sbr.rel (%p143) target = $region20
        $region19: #{tpu_custom_call.1} parent=11 // pred_region
          _
        $region20: #{tpu_custom_call.1} parent=11 // pred_fallthru
          _
      $region12: #{tpu_custom_call.1} parent=5 // pred_fallthru
        _
      %p146 = scmp.lt.s32.totalorder %s15, 2
      // Predicated region
      $region21: #{tpu_custom_call.1} parent=5 // pred_check
        %p147 = pneg %p146
      $region22: #{tpu_custom_call.1} parent=5 // pred_check_branch
        %149 = sbr.rel (%p147) target = $region24
      $region23: #{tpu_custom_call.1} parent=5 // pred_region
        // Predicated region
        $region25: #{tpu_custom_call.1} parent=23 // pred_check
          %p150 = pneg %p49
        $region26: #{tpu_custom_call.1} parent=23 // pred_check_branch
          %152 = sbr.rel (%p150) target = $region28
        $region27: #{tpu_custom_call.1} parent=23 // pred_region
          %s153 = sand.u32 %s39, 1
          %s154 = scalar_lea.sflag [#allocation3], %s153
          %s155 = sand.u32 %s39, 1
          %s156 = smul.addr %s155, 32
          %s157 = scalar_lea.vmem [#allocation2], %s156
          %s158 = smul.u32 2, %s23
          %s160 = ssub.s32 512, 512
          %161 = vsyncadd %s154, %s160
          %s162 = smul.addr %s22, 4
          %s163 = sadd.s32 %s158, %s162
          %s164 = smul.addr %s163, 128
          %s165 = scalar_lea.hbm %s0, %s164
          %s166 = sshll.u32 %s157, 4
          %s167 = int_to_ptr.vmem [resolvable:$true] %s166
          %172 = dma.hbm_to_vmem [thread:$0]  %s165, 512, %s167, %s154, 256, 256, 16
        $region28: #{tpu_custom_call.1} parent=23 // pred_fallthru
          _
      $region24: #{tpu_custom_call.1} parent=5 // pred_fallthru
        _
      %p173 = scmp.le.s32.totalorder 1, %s15
      %p174 = scmp.lt.s32.totalorder %s15, 3
      %p175 = pnand %p173, %p174
      %p176 = pneg %p175
      // Predicated region
      $region29: #{tpu_custom_call.1} parent=5 // pred_check
        _
      $region30: #{tpu_custom_call.1} parent=5 // pred_check_branch
        %178 = sbr.rel (%p175) target = $region32
      $region31: #{tpu_custom_call.1} parent=5 // pred_region
        %s179 = ssub.s32 %s15, 1
        %s180 = sand.u32 %s42, 1
        %s181 = scalar_lea.sflag [#allocation3], %s180
        %s182 = sand.u32 %s42, 1
        %s183 = smul.addr %s182, 32
        %s184 = scalar_lea.vmem [#allocation2], %s183
        // Predicated region
        $region33: #{tpu_custom_call.1} parent=31 // pred_check
          %p185 = pneg %p55
        $region34: #{tpu_custom_call.1} parent=31 // pred_check_branch
          %187 = sbr.rel (%p185) target = $region36
        $region35: #{tpu_custom_call.1} parent=31 // pred_region
          %188 = dma.done %s181, 512
        $region36: #{tpu_custom_call.1} parent=31 // pred_fallthru
          _
        %s189 = sand.u32 %s42, 1
        %s190 = scalar_lea.sflag [#allocation3], %s189
        %s191 = sand.u32 %s42, 1
        %s192 = smul.addr %s191, 32
        %s193 = scalar_lea.vmem [#allocation2], %s192
        %p194 = pneg %p55
        %p195 = pneg %p52
        %p196 = pneg %p76
        %p197 = pneg %p73
        %p198 = pneg %p97
        %p199 = pneg %p94
        %p200 = pneg %p125
        %p201 = pneg %p122
        %s202 = sand.u32 %s112, 1
        %s203 = scalar_lea.sflag [#allocation4], %s202
        %s204 = sand.u32 %s112, 1
        %s205 = smul.addr %s204, 32
        %s206 = scalar_lea.vmem [#allocation5], %s205
        %s207 = smul.u32 2, %s25
        %s208 = smul.u32 2, %s25
        %v210 = vld [vmem:[%s184] sm:$0xff]
        %v211 = vld [vmem:[%s184 + $0x8] sm:$0xff]
        %v212 = vld [vmem:[%s184 + $0x10] sm:$0xff]
        %v213 = vld [vmem:[%s184 + $0x18] sm:$0xff]
        %v214 = vpack.c.bf16 %v212, %v210
        %v215 = vpack.c.bf16 %v213, %v211
        %v216 = vld [vmem:[%s1] sm:$0xf]
        %v217 = vld [vmem:[%s1 + $0x4] sm:$0xf]
        %v218 = vld [vmem:[%s1 + $0x8] sm:$0xf]
        %v219 = vld [vmem:[%s1 + $0xc] sm:$0xf]
        %v220 = vld [vmem:[%s2] sm:$0xff]
        %v221 = vld [vmem:[%s2 + $0x8] sm:$0xff]
        %v222 = vld [vmem:[%s2 + $0x10] sm:$0xff]
        %v223 = vld [vmem:[%s2 + $0x18] sm:$0xff]
        %225 = vset.pattern.permute.xlu0 0
        %226 = vperm.xlu0 %225, %v220
        %v227 = vpop.permute.xlu0 %226
        %230 = vset.pattern.permute.xlu0 0
        %231 = vperm.xlu0 %230, %v221
        %v232 = vpop.permute.xlu0 %231
        %235 = vset.pattern.permute.xlu0 0
        %236 = vperm.xlu0 %235, %v222
        %v237 = vpop.permute.xlu0 %236
        %240 = vset.pattern.permute.xlu0 0
        %241 = vperm.xlu0 %240, %v223
        %v242 = vpop.permute.xlu0 %241
        %v248 = vunpack.c.l.b16 %v216
        %v249 = vunpack.c.l.b16 %v217
        %v250 = vunpack.c.l.b16 %v218
        %v251 = vunpack.c.l.b16 %v219
        %v252 = vpack.c.b16 %v249, %v248
        %v253 = vpack.c.b16 %v251, %v250
        %vm254 = vcmask 130048
        %v256 = vsel %vm254, %v252, 0
        %v259 = vsel %vm254, %v253, 0
        %261 = vmatprep.subr.bf16.mxu0 %v215
        %262 = vmatpush1.bf16.msra.mxu0 %v214
        %263 = vmatprep.subr.bf16.mxu0 0
        %264 = vmatpush1.bf16.msra.mxu0 0
        %265 = vmatprep.subr.bf16.mxu0 0
        %266 = vmatpush1.bf16.msra.mxu0 0
        %267 = vmatprep.subr.bf16.mxu0 0
        %268 = vmatpush1.bf16.msra.mxu0 0
        %269 = vmatprep.subr.bf16.mxu0 0
        %270 = vmatpush1.bf16.msra.mxu0 0
        %271 = vmatprep.subr.bf16.mxu0 0
        %272 = vmatpush1.bf16.msra.mxu0 0
        %273 = vmatprep.subr.bf16.mxu0 0
        %274 = vmatpush1.bf16.msra.mxu0 0
        %275 = vmatprep.subr.bf16.mxu0 0
        %276 = vmatpush1.bf16.msra.mxu0 0
        %277 = vmatprep.subr.bf16.mxu0 0
        %278 = vmatpush1.bf16.msra.mxu0 0
        %279 = vmatprep.subr.bf16.mxu0 0
        %280 = vmatpush1.bf16.msra.mxu0 0
        %281 = vmatprep.subr.bf16.mxu0 0
        %282 = vmatpush1.bf16.msra.mxu0 0
        %283 = vmatprep.subr.bf16.mxu0 0
        %284 = vmatpush1.bf16.msra.mxu0 0
        %285 = vmatprep.subr.bf16.mxu0 0
        %286 = vmatpush1.bf16.msra.mxu0 0
        %287 = vmatprep.subr.bf16.mxu0 0
        %288 = vmatpush1.bf16.msra.mxu0 0
        %289 = vmatprep.subr.bf16.mxu0 0
        %290 = vmatpush1.bf16.msra.mxu0 0
        %291 = vmatprep.subr.bf16.mxu0 0
        %292 = vmatpush1.bf16.msra.mxu0 0
        %293 = vmatprep.mubr.bf16.mxu0 0
        %294 = vmatmul.mubr.bf16.gmra.mrb[0].mxu0 %v256
        %v295 = vpop.f32.mrb[0].mxu0
        %v296 = vadd.f32 %v227, %v295
        %v297 = vpop.f32.mrb[0].mxu0
        %v298 = vadd.f32 %v227, %v297
        %v299 = vpop.f32.mrb[0].mxu0
        %v300 = vadd.f32 %v232, %v299
        %v301 = vpop.f32.mrb[0].mxu0
        %v302 = vadd.f32 %v232, %v301
        %303 = vmatprep.mubr.bf16.mxu0 0
        %304 = vmatmul.mubr.bf16.gmra.mrb[0].mxu0 %v259
        %v305 = vpop.f32.mrb[0].mxu0
        %v306 = vadd.f32 %v237, %v305
        %v307 = vpop.f32.mrb[0].mxu0
        %v308 = vadd.f32 %v237, %v307
        %v309 = vpop.f32.mrb[0].mxu0
        %v310 = vadd.f32 %v242, %v309
        %v311 = vpop.f32.mrb[0].mxu0
        %v312 = vadd.f32 %v242, %v311
        %313 = vdwg.mxu0
        %v314 = vmul.f32 %v296, 0.5
        %v315 = vmul.f32 %v298, 0.5
        %v316 = vmul.f32 %v300, 0.5
        %v317 = vmul.f32 %v302, 0.5
        %v318 = vmul.f32 %v306, 0.5
        %v319 = vmul.f32 %v308, 0.5
        %v320 = vmul.f32 %v310, 0.5
        %v321 = vmul.f32 %v312, 0.5
        %v322 = vmul.f32 %v296, 0.70710677
        %v323 = vmul.f32 %v298, 0.70710677
        %v324 = vmul.f32 %v300, 0.70710677
        %v325 = vmul.f32 %v302, 0.70710677
        %v326 = vmul.f32 %v306, 0.70710677
        %v327 = vmul.f32 %v308, 0.70710677
        %v328 = vmul.f32 %v310, 0.70710677
        %v329 = vmul.f32 %v312, 0.70710677
        %v330 = verf.f32.pop %v322
        %v331 = verf.f32.pop %v323
        %v332 = verf.f32.pop %v324
        %v333 = verf.f32.pop %v325
        %v334 = verf.f32.pop %v326
        %v335 = verf.f32.pop %v327
        %v336 = verf.f32.pop %v328
        %v337 = verf.f32.pop %v329
        %v338 = vadd.f32 %v330, 1.0
        %v339 = vadd.f32 %v331, 1.0
        %v340 = vadd.f32 %v332, 1.0
        %v341 = vadd.f32 %v333, 1.0
        %v342 = vadd.f32 %v334, 1.0
        %v343 = vadd.f32 %v335, 1.0
        %v344 = vadd.f32 %v336, 1.0
        %v345 = vadd.f32 %v337, 1.0
        %v346 = vmul.f32 %v314, %v338
        %v347 = vmul.f32 %v315, %v339
        %v348 = vmul.f32 %v316, %v340
        %v349 = vmul.f32 %v317, %v341
        %v350 = vmul.f32 %v318, %v342
        %v351 = vmul.f32 %v319, %v343
        %v352 = vmul.f32 %v320, %v344
        %v353 = vmul.f32 %v321, %v345
        %v354 = vpack.c.bf16 %v348, %v346
        %v355 = vpack.c.bf16 %v349, %v347
        %v356 = vpack.c.bf16 %v352, %v350
        %v357 = vpack.c.bf16 %v353, %v351
        %v362 = vunpack.c.l.b16 %v354
        %v363 = vunpack.c.l.b16 %v355
        %v364 = vunpack.c.h.b16 %v354
        %v365 = vunpack.c.h.b16 %v355
        %v366 = vunpack.c.l.b16 %v356
        %v367 = vunpack.c.l.b16 %v357
        %v368 = vunpack.c.h.b16 %v356
        %v369 = vunpack.c.h.b16 %v357
        %v370 = vpack.c.b16 %v363, %v362
        %v371 = vpack.c.b16 %v365, %v364
        %v372 = vpack.c.b16 %v367, %v366
        %v373 = vpack.c.b16 %v369, %v368
        %378 = vst [vmem:[%s206] sm:$0xff] %v370
        %379 = vst [vmem:[%s206 + $0x8] sm:$0xff] %v371
        %380 = vst [vmem:[%s206 + $0x10] sm:$0xff] %v372
        %381 = vst [vmem:[%s206 + $0x18] sm:$0xff] %v373
        %s382 = sand.u32 %s112, 1
        %s383 = scalar_lea.sflag [#allocation4], %s382
        %s384 = sand.u32 %s112, 1
        %s385 = smul.addr %s384, 32
        %s386 = scalar_lea.vmem [#allocation5], %s385
        // Predicated region
        $region37: #{tpu_custom_call.1} parent=31 // pred_check
          %p387 = pneg %p122
        $region38: #{tpu_custom_call.1} parent=31 // pred_check_branch
          %389 = sbr.rel (%p387) target = $region40
        $region39: #{tpu_custom_call.1} parent=31 // pred_region
          %s390 = smul.u32 2, %s25
          %s392 = ssub.s32 512, 512
          %393 = vsyncadd %s383, %s392
          %s394 = smul.addr %s24, 8
          %s395 = sadd.s32 %s390, %s394
          %s396 = smul.addr %s395, 64
          %s397 = scalar_lea.hbm %s3, %s396
          %s398 = sshll.u32 %s386, 4
          %s399 = int_to_ptr.vmem [resolvable:$true] %s398
          %404 = dma.vmem_to_hbm [thread:$0]  %s399, 512, %s397, %s383, 128, 128, 8
        $region40: #{tpu_custom_call.1} parent=31 // pred_fallthru
          _
      $region32: #{tpu_custom_call.1} parent=5 // pred_fallthru
        _
      %p405 = scmp.le.s32.totalorder 2, %s15
      // Predicated region
      $region41: #{tpu_custom_call.1} parent=5 // pred_check
        %p406 = pneg %p405
      $region42: #{tpu_custom_call.1} parent=5 // pred_check_branch
        %408 = sbr.rel (%p406) target = $region44
      $region43: #{tpu_custom_call.1} parent=5 // pred_region
        %s409 = ssub.s32 %s15, 2
        // Predicated region
        $region45: #{tpu_custom_call.1} parent=43 // pred_check
          %p410 = pneg %p128
        $region46: #{tpu_custom_call.1} parent=43 // pred_check_branch
          %412 = sbr.rel (%p410) target = $region48
        $region47: #{tpu_custom_call.1} parent=43 // pred_region
          %s413 = sand.u32 %s113, 1
          %s414 = scalar_lea.sflag [#allocation4], %s413
          %s415 = sand.u32 %s113, 1
          %s416 = smul.addr %s415, 32
          %s417 = scalar_lea.vmem [#allocation5], %s416
          %418 = dma.done %s414, 512
        $region48: #{tpu_custom_call.1} parent=43 // pred_fallthru
          _
      $region44: #{tpu_custom_call.1} parent=5 // pred_fallthru
        _
    $region6: #{tpu_custom_call.1} parent=1 // loop_footer
      %s19 = sadd.s32 1, %s15
    $region7: #{tpu_custom_call.1} parent=1 // loop_footer_branch
      %14 = sbr.rel target = $region3
    $region8: #{tpu_custom_call.1} parent=1 // loop_exit
      _
    %419 = vsyncpa [#allocation3], 1
    %s420 = scalar_lea.sflag [#allocation3], 1
    %421 = vsyncpa %s420, 1
    %422 = vsyncpa [#allocation4], 1
    %s423 = scalar_lea.sflag [#allocation4], 1
    %424 = vsyncpa %s423, 1

</llo_original>
